<compile_context>
chip_gen: v7x
topology: tpu7x:2x2x1
jax: 0.10.0
libtpu: 0.0.40
codegen_flags: <defaults>
</compile_context>

<pallas_src>
import jax
import jax.numpy as jnp
from jax import lax
from jax.experimental import pallas as pl
from jax.experimental.pallas import tpu as pltpu

_LANES = 128
# Row-tile alignment satisfying f32 (8), bf16 (16) and int8 (32) sublane packing.
_ROW_ALIGN = 32
# Inner-loop chunk: bounds element-wise temporaries to ~a few hundred KiB.
_CHUNK_ROWS = 512


def _round_up(x, m):
    return -(-x // m) * m


def _select_tiling():
    """Per-generation (max_tile_rows, vmem_limit_bytes)."""
    try:
        vmem_cap = pltpu.get_tpu_info().vmem_capacity_bytes
    except Exception:
        vmem_cap = None
    if vmem_cap is not None and vmem_cap >= 96 * 1024 * 1024:
        # v5e / v6e (128 MiB physical VMEM): 8 MiB/input tiles,
        # 3 inputs x 2 pipeline buffers = 48 MiB.
        return 16384, 64 * 1024 * 1024
    # v7x (64 MiB per-TC VMEM) or unknown: 4 MiB/input tiles (24 MiB
    # double-buffered), keep vmem limit well under the 64 MiB cap.
    return 8192, 40 * 1024 * 1024


def _make_mse_partial_kernel(tile_rows, chunk_rows, valid_rows, need_mask):
    """Kernel writing one (2,128) partial block per tile.

    Row 0 = per-lane sum of mask * (pred - target)^2, row 1 = per-lane mask sum.
    `valid_rows` is static (trace-time) — rows >= valid_rows belong to the
    partial last grid block and contain garbage, so they are zeroed.
    """
    n_chunks = tile_rows // chunk_rows

    def kernel(p_ref, t_ref, m_ref, out_ref):
        tile_row0 = pl.program_id(0) * tile_rows

        def body(c, carry):
            wse_acc, m_acc = carry
            r0 = pl.multiple_of(c * chunk_rows, chunk_rows)
            p = p_ref[pl.ds(r0, chunk_rows), :].astype(jnp.float32)
            t = t_ref[pl.ds(r0, chunk_rows), :].astype(jnp.float32)
            m = m_ref[pl.ds(r0, chunk_rows), :].astype(jnp.float32)
            res = p - t
            wse = m * res * res
            if need_mask:
                # Mask garbage rows of the partial last block (cheap VPU work;
                # applied on every tile since compute has huge slack vs DMA).
                row_ids = (tile_row0 + r0
                           + lax.broadcasted_iota(jnp.int32,
                                                  (chunk_rows, _LANES), 0))
                ok = row_ids < valid_rows
                wse = jnp.where(ok, wse, 0.0)
                m = jnp.where(ok, m, 0.0)
            return (wse_acc + jnp.sum(wse, axis=0, keepdims=True),
                    m_acc + jnp.sum(m, axis=0, keepdims=True))

        init = (jnp.zeros((1, _LANES), jnp.float32),
                jnp.zeros((1, _LANES), jnp.float32))
        wse_acc, m_acc = lax.fori_loop(0, n_chunks, body, init)
        # Single lane-dense store of the (2, 128) partial block.
        out_ref[...] = jnp.concatenate([wse_acc, m_acc], axis=0)

    return kernel


def mse_loss_pallas(prediction, target, mask, if_pixel_input=False):
    assert prediction.shape == target.shape == mask.shape
    del if_pixel_input  # batch-based reduction: same global ratio either way

    n = 1
    for d in prediction.shape:
        n *= d
    if n == 0:
        return jnp.float32(0.0)

    p = prediction.reshape(-1)
    t = target.reshape(-1)
    m = mask.reshape(-1)

    rows = -(-n // _LANES)
    pad = rows * _LANES - n
    if pad:
        # Only when numel is not a multiple of 128 (<= 127 elements of zero
        # padding; mask padding = 0, so padded elements add nothing).
        p = jnp.pad(p, (0, pad))
        t = jnp.pad(t, (0, pad))
        m = jnp.pad(m, (0, pad))

    # Lane-dense view; contiguous row-major reshapes are bitcasts (no HBM copy).
    p2 = p.reshape(rows, _LANES)
    t2 = t.reshape(rows, _LANES)
    m2 = m.reshape(rows, _LANES)

    max_tile_rows, vmem_limit = _select_tiling()
    tile_rows = min(max_tile_rows, _round_up(rows, _ROW_ALIGN))
    if tile_rows >= _CHUNK_ROWS:
        tile_rows = min(max_tile_rows, _round_up(tile_rows, _CHUNK_ROWS))
        chunk_rows = _CHUNK_ROWS
    else:
        chunk_rows = tile_rows
    num_tiles = -(-rows // tile_rows)
    need_mask = (num_tiles * tile_rows != rows)

    kernel = _make_mse_partial_kernel(tile_rows, chunk_rows, rows, need_mask)

    in_spec = pl.BlockSpec((tile_rows, _LANES), lambda i: (i, 0))
    # One lane-dense (2, 128) partial-sum block per tile (leading dim squeezed).
    out_spec = pl.BlockSpec((None, 2, _LANES), lambda i: (i, 0, 0))

    partials = pl.pallas_call(
        kernel,
        out_shape=jax.ShapeDtypeStruct((num_tiles, 2, _LANES), jnp.float32),
        grid_spec=pltpu.PrefetchScalarGridSpec(
            num_scalar_prefetch=0,
            grid=(num_tiles,),
            in_specs=[in_spec, in_spec, in_spec],
            out_specs=out_spec,
        ),
        compiler_params=pltpu.CompilerParams(
            dimension_semantics=("parallel",),
            vmem_limit_bytes=vmem_limit,
        ),
    )(p2, t2, m2)

    num = jnp.sum(partials[:, 0, :])
    den = jnp.sum(partials[:, 1, :])
    divisor = 2.0 * den
    safe_div = jnp.where(divisor == 0.0, jnp.float32(1.0), divisor)
    # PyTorch returns 0 when the divisor is exactly 0 (NaN-safe division).
    return jnp.where(divisor == 0.0, jnp.float32(0.0), num / safe_div)


def _mse_loss_ref(prediction, target, mask):
    # Pure-JAX reference mirroring the PyTorch batch-based path.
    M = jnp.sum(mask, axis=(1, 2))
    res = prediction - target
    image_loss = jnp.sum(mask * res * res, axis=(1, 2))
    divisor = jnp.sum(2.0 * M)
    return jnp.where(divisor == 0.0, 0.0, jnp.sum(image_loss) / divisor)


if __name__ == "__main__":
    key = jax.random.PRNGKey(0)
    k1, k2, k3, k4, k5, k6 = jax.random.split(key, 6)

    # Case 1: small, lane-aligned input (numel % 128 == 0, no padding path).
    B, H, W = 2, 16, 16
    prediction = jax.random.normal(k1, (B, H, W), dtype=jnp.float32)
    target = jax.random.normal(k2, (B, H, W), dtype=jnp.float32)
    mask = (jax.random.uniform(k3, (B, H, W)) < 0.7).astype(jnp.float32)

    loss = jax.block_until_ready(mse_loss_pallas(prediction, target, mask))
    ref = _mse_loss_ref(prediction, target, mask)
    assert jnp.allclose(loss, ref, rtol=1e-5, atol=1e-6), (loss, ref)

    # Case 2: odd shape (exercises <=127-element pad + in-kernel row masking).
    B2, H2, W2 = 3, 17, 23
    p_o = jax.random.normal(k4, (B2, H2, W2), dtype=jnp.float32)
    t_o = jax.random.normal(k5, (B2, H2, W2), dtype=jnp.float32)
    m_o = (jax.random.uniform(k6, (B2, H2, W2)) < 0.5).astype(jnp.float32)

    loss2 = jax.block_until_ready(mse_loss_pallas(p_o, t_o, m_o))
    ref2 = _mse_loss_ref(p_o, t_o, m_o)
    assert jnp.allclose(loss2, ref2, rtol=1e-5, atol=1e-6), (loss2, ref2)

    # Case 3: all-zero mask -> loss must be exactly 0.
    zero_mask = jnp.zeros((B, H, W), dtype=jnp.float32)
    loss3 = jax.block_until_ready(mse_loss_pallas(prediction, target, zero_mask))
    assert jnp.allclose(loss3, 0.0), loss3

    # Case 4: bf16 inputs streamed without wrapper upcast (halves HBM bytes).
    p_b = prediction.astype(jnp.bfloat16)
    t_b = target.astype(jnp.bfloat16)
    loss4 = jax.block_until_ready(mse_loss_pallas(p_b, t_b, mask))
    ref4 = _mse_loss_ref(p_b.astype(jnp.float32), t_b.astype(jnp.float32), mask)
    assert jnp.allclose(loss4, ref4, rtol=1e-5, atol=1e-6), (loss4, ref4)

    print("KERNEL_OK")
</pallas_src>

<mosaic_0001>
module attributes {stable_mosaic.version = 11 : i64} {
  func.func @kernel(%arg0: i32, %arg1: memref<32x128xf32, #tpu.memory_space<vmem>>, %arg2: memref<32x128xf32, #tpu.memory_space<vmem>>, %arg3: memref<32x128xf32, #tpu.memory_space<vmem>>, %arg4: memref<1x2x128xf32, #tpu.memory_space<vmem>>) attributes {dimension_semantics = [#tpu.dimension_semantics<parallel>], iteration_bounds = array<i64: 1>, scalar_prefetch = 0 : i64, scratch_operands = 0 : i64, tpu.core_type = #tpu.core_type<tc>, window_params = [{transform_indices = @transform_0, window_bounds = array<i64: 32, 128>}, {transform_indices = @transform_1, window_bounds = array<i64: 32, 128>}, {transform_indices = @transform_2, window_bounds = array<i64: 32, 128>}, {transform_indices = @transform_3, window_bounds = array<i64: 1, 2, 128>}]} {
    %c32_i32 = arith.constant 32 : i32
    %0 = arith.muli %arg0, %c32_i32 : i32
    %cst = arith.constant 0.000000e+00 : f32
    %1 = vector.broadcast %cst : f32 to vector<1x128xf32>
    %cst_0 = arith.constant 0.000000e+00 : f32
    %2 = vector.broadcast %cst_0 : f32 to vector<1x128xf32>
    %c0_i32 = arith.constant 0 : i32
    %c32_i32_1 = arith.constant 32 : i32
    %3 = arith.muli %c0_i32, %c32_i32_1 : i32
    %4 = tpu.assume_multiple %3, 32 : i32
    %5 = arith.index_cast %4 : i32 to index
    %c0 = arith.constant 0 : index
    %6 = vector.load %arg1[%5, %c0] : memref<32x128xf32, #tpu.memory_space<vmem>>, vector<32x128xf32>
    %7 = arith.index_cast %4 : i32 to index
    %c0_2 = arith.constant 0 : index
    %8 = vector.load %arg2[%7, %c0_2] : memref<32x128xf32, #tpu.memory_space<vmem>>, vector<32x128xf32>
    %9 = arith.index_cast %4 : i32 to index
    %c0_3 = arith.constant 0 : index
    %10 = vector.load %arg3[%9, %c0_3] : memref<32x128xf32, #tpu.memory_space<vmem>>, vector<32x128xf32>
    %11 = arith.subf %6, %8 : vector<32x128xf32>
    %12 = arith.mulf %10, %11 : vector<32x128xf32>
    %13 = arith.mulf %12, %11 : vector<32x128xf32>
    %14 = arith.addi %0, %4 : i32
    %15 = tpu.iota {dimensions = array<i32: 0>} : vector<32x128xi32>
    %16 = vector.broadcast %14 : i32 to vector<32x128xi32>
    %17 = arith.addi %16, %15 : vector<32x128xi32>
    %c4_i32 = arith.constant 4 : i32
    %18 = vector.broadcast %c4_i32 : i32 to vector<32x128xi32>
    %19 = arith.cmpi slt, %17, %18 : vector<32x128xi32>
    %cst_4 = arith.constant 0.000000e+00 : f32
    %20 = vector.broadcast %cst_4 : f32 to vector<32x128xf32>
    %21 = arith.select %19, %13, %20 : vector<32x128xi1>, vector<32x128xf32>
    %cst_5 = arith.constant 0.000000e+00 : f32
    %22 = vector.broadcast %cst_5 : f32 to vector<32x128xf32>
    %23 = arith.select %19, %10, %22 : vector<32x128xi1>, vector<32x128xf32>
    %cst_6 = arith.constant dense<0.000000e+00> : vector<128xf32>
    %24 = vector.multi_reduction <add>, %21, %cst_6 [0] : vector<32x128xf32> to vector<128xf32>
    %25 = vector.shape_cast %24 : vector<128xf32> to vector<1x128xf32>
    %26 = arith.addf %1, %25 : vector<1x128xf32>
    %cst_7 = arith.constant dense<0.000000e+00> : vector<128xf32>
    %27 = vector.multi_reduction <add>, %23, %cst_7 [0] : vector<32x128xf32> to vector<128xf32>
    %28 = vector.shape_cast %27 : vector<128xf32> to vector<1x128xf32>
    %29 = arith.addf %2, %28 : vector<1x128xf32>
    %c1_i32 = arith.constant 1 : i32
    %30 = tpu.concatenate %26, %29 in 0 : vector<1x128xf32>, vector<1x128xf32> -> vector<2x128xf32>
    %c0_8 = arith.constant 0 : index
    %c0_9 = arith.constant 0 : index
    %c0_10 = arith.constant 0 : index
    %31 = vector.load %arg4[%c0_8, %c0_9, %c0_10] : memref<1x2x128xf32, #tpu.memory_space<vmem>>, vector<1x2x128xf32>
    %32 = vector.shape_cast %31 : vector<1x2x128xf32> to vector<2x128xf32>
    %33 = vector.shape_cast %30 : vector<2x128xf32> to vector<1x2x128xf32>
    tpu.vector_store %arg4[%c0_8, %c0_9, %c0_10], %33 {strides = array<i32>} : memref<1x2x128xf32, #tpu.memory_space<vmem>>, vector<1x2x128xf32>,
    return
  }
  func.func @transform_0(%arg0: i32) -> (i32, i32) {
    %c0_i32 = arith.constant 0 : i32
    %c0_i32_0 = arith.constant 0 : i32
    return %arg0, %c0_i32 : i32, i32
  }
  func.func @transform_1(%arg0: i32) -> (i32, i32) {
    %c0_i32 = arith.constant 0 : i32
    %c0_i32_0 = arith.constant 0 : i32
    return %arg0, %c0_i32 : i32, i32
  }
  func.func @transform_2(%arg0: i32) -> (i32, i32) {
    %c0_i32 = arith.constant 0 : i32
    %c0_i32_0 = arith.constant 0 : i32
    return %arg0, %c0_i32 : i32, i32
  }
  func.func @transform_3(%arg0: i32) -> (i32, i32, i32) {
    %c0_i32 = arith.constant 0 : i32
    %c0_i32_0 = arith.constant 0 : i32
    %c0_i32_1 = arith.constant 0 : i32
    return %arg0, %c0_i32, %c0_i32_0 : i32, i32, i32
  }
}

</mosaic_0001>

<llo_original>
// kernel: tpu_custom_call.1
$region0: #{tpu_custom_call.1}
  #allocation0 [shape = 'u32[]', space=smem, size = 0x4, offset = 0x4, fixed_abs, tag = 'smem constant byte address 0x4 - core index']
  #allocation1 [shape = 'u32[144,128]{1,0:T(1,128)}', space=vmem, size = 0x12000, scoped, tag = 'internal scratch']
  %s0 = inlined_call_operand.hbm [shape: f32[4,128], index: 0, kind: input, shape index: {}]
  %s1 = inlined_call_operand.hbm [shape: f32[4,128], index: 1, kind: input, shape index: {}]
  %s2 = inlined_call_operand.vmem [shape: f32[4,128], index: 2, kind: input, shape index: {}]
  %s3 = inlined_call_operand.hbm [shape: f32[1,2,128], index: 3, kind: output, shape index: {}]
  %s4 = sld [smem:[#allocation0]]
  $region30: #{tpu_custom_call.1} parent=0
    _
  %s6 = ssub.s32 1, %s4
  %s7 = scalar_select 0, %s6, %s4
  $region1: #{tpu_custom_call.1} parent=0
    #allocation2 [shape = 'u8[16384]{0}', space=vmem, size = 0x4000, scoped, tag = 'input window, operand 0, single buffered']
    #allocation3 [shape = 's32[1]{0}', space=sflag, size = 0x4, scoped, tag = 'scoped memory for tpu_custom_call.1']
    #allocation4 [shape = 's32[1]{0}', space=sflag, size = 0x4, scoped, tag = 'scoped memory for tpu_custom_call.1']
    #allocation5 [shape = 'u8[16384]{0}', space=vmem, size = 0x4000, scoped, tag = 'input window, operand 1, single buffered']
    #allocation6 [shape = 's32[1]{0}', space=sflag, size = 0x4, scoped, tag = 'scoped memory for tpu_custom_call.1']
    #allocation7 [shape = 'u8[1024]{0}', space=vmem, size = 0x400, scoped, tag = 'output window, operand 0, single buffered']
    %8 = vsyncpa [#allocation3], 0
    %9 = vsyncpa [#allocation6], 0
    %10 = vsyncpa [#allocation4], 0
    // Predicated region
    $region2: #{tpu_custom_call.1} parent=1 // pred_check
      _
    $region3: #{tpu_custom_call.1} parent=1 // pred_check_branch
      %12 = sbr.rel (0) target = $region5
    $region4: #{tpu_custom_call.1} parent=1 // pred_region
      %s14 = ssub.s32 512, 64
      %15 = vsyncadd [#allocation3], %s14
      %s16 = sshll.u32 [#allocation2], 4
      %s17 = int_to_ptr.vmem [resolvable:$true] %s16
      %22 = dma.hbm_to_vmem [thread:$0]  %s0, 64, %s17, [#allocation3], 64, 64, 4
    $region5: #{tpu_custom_call.1} parent=1 // pred_fallthru
      _
    // Predicated region
    $region6: #{tpu_custom_call.1} parent=1 // pred_check
      _
    $region7: #{tpu_custom_call.1} parent=1 // pred_check_branch
      %24 = sbr.rel (0) target = $region9
    $region8: #{tpu_custom_call.1} parent=1 // pred_region
      %s26 = ssub.s32 512, 64
      %27 = vsyncadd [#allocation6], %s26
      %s28 = sshll.u32 [#allocation5], 4
      %s29 = int_to_ptr.vmem [resolvable:$true] %s28
      %34 = dma.hbm_to_vmem [thread:$0]  %s1, 64, %s29, [#allocation6], 64, 64, 4
    $region9: #{tpu_custom_call.1} parent=1 // pred_fallthru
      _
    // Predicated region
    $region10: #{tpu_custom_call.1} parent=1 // pred_check
      _
    $region11: #{tpu_custom_call.1} parent=1 // pred_check_branch
      %36 = sbr.rel (0) target = $region13
    $region12: #{tpu_custom_call.1} parent=1 // pred_region
      _
    $region13: #{tpu_custom_call.1} parent=1 // pred_fallthru
      _
    // Predicated region
    $region14: #{tpu_custom_call.1} parent=1 // pred_check
      _
    $region15: #{tpu_custom_call.1} parent=1 // pred_check_branch
      %38 = sbr.rel (0) target = $region17
    $region16: #{tpu_custom_call.1} parent=1 // pred_region
      %39 = dma.done [#allocation3], 512
    $region17: #{tpu_custom_call.1} parent=1 // pred_fallthru
      _
    // Predicated region
    $region18: #{tpu_custom_call.1} parent=1 // pred_check
      _
    $region19: #{tpu_custom_call.1} parent=1 // pred_check_branch
      %41 = sbr.rel (0) target = $region21
    $region20: #{tpu_custom_call.1} parent=1 // pred_region
      %42 = dma.done [#allocation6], 512
    $region21: #{tpu_custom_call.1} parent=1 // pred_fallthru
      _
    %s43 = smul.u32 0, 32
    %v44 = vld [vmem:[#allocation2] sm:$0xff]
    %v45 = vld [vmem:[#allocation2 + $0x8] sm:$0xff]
    %v46 = vld [vmem:[#allocation2 + $0x10] sm:$0xff]
    %v47 = vld [vmem:[#allocation2 + $0x18] sm:$0xff]
    %v48 = vld [vmem:[#allocation5] sm:$0xff]
    %v49 = vld [vmem:[#allocation5 + $0x8] sm:$0xff]
    %v50 = vld [vmem:[#allocation5 + $0x10] sm:$0xff]
    %v51 = vld [vmem:[#allocation5 + $0x18] sm:$0xff]
    %v52 = vld [vmem:[%s2] sm:$0xff]
    %v53 = vld [vmem:[%s2 + $0x8] sm:$0xff]
    %v54 = vld [vmem:[%s2 + $0x10] sm:$0xff]
    %v55 = vld [vmem:[%s2 + $0x18] sm:$0xff]
    %v56 = vsub.f32 %v44, %v48
    %v57 = vsub.f32 %v45, %v49
    %v58 = vsub.f32 %v46, %v50
    %v59 = vsub.f32 %v47, %v51
    %v60 = vmul.f32 %v52, %v56
    %v61 = vmul.f32 %v53, %v57
    %v62 = vmul.f32 %v54, %v58
    %v63 = vmul.f32 %v55, %v59
    %v64 = vmul.f32 %v60, %v56
    %v65 = vmul.f32 %v61, %v57
    %v66 = vmul.f32 %v62, %v58
    %v67 = vmul.f32 %v63, %v59
    %s68 = sadd.s32 %s43, 0
    %v69 = vlaneseq
    %v70 = vshrl.u32 %v69, 7
    %v71 = vadd.s32 %v70, 8
    %v72 = vadd.s32 %v70, 16
    %v73 = vadd.s32 %v70, 24
    %v74 = vstv %s68
    %v75 = vadd.s32 %v74, %v70
    %v76 = vadd.s32 %v74, %v71
    %v77 = vadd.s32 %v74, %v72
    %v78 = vadd.s32 %v74, %v73
    %vm79 = vcmp.lt.s32.totalorder %v75, 4
    %vm80 = vcmp.lt.s32.totalorder %v76, 4
    %vm81 = vcmp.lt.s32.totalorder %v77, 4
    %vm82 = vcmp.lt.s32.totalorder %v78, 4
    %v83 = vsel %vm79, %v64, 0.0
    %v84 = vsel %vm80, %v65, 0.0
    %v85 = vsel %vm81, %v66, 0.0
    %v86 = vsel %vm82, %v67, 0.0
    %v87 = vsel %vm79, %v52, 0.0
    %v88 = vsel %vm80, %v53, 0.0
    %v89 = vsel %vm81, %v54, 0.0
    %v90 = vsel %vm82, %v55, 0.0
    %v91 = vadd.f32 %v83, %v84
    %v92 = vadd.f32 %v91, %v85
    %v93 = vadd.f32 %v92, %v86
    %v94 = vrot.slane %v93, 4
    %v95 = vadd.f32 %v93, %v94
    %v96 = vrot.slane %v95, 2
    %v97 = vadd.f32 %v95, %v96
    %v98 = vrot.slane %v97, 1
    %v99 = vadd.f32 %v97, %v98
    %v100 = vadd.f32 %v99, 0.0
    %v101 = vadd.f32 %v87, %v88
    %v102 = vadd.f32 %v101, %v89
    %v103 = vadd.f32 %v102, %v90
    %v104 = vrot.slane %v103, 4
    %v105 = vadd.f32 %v103, %v104
    %v106 = vrot.slane %v105, 2
    %v107 = vadd.f32 %v105, %v106
    %v108 = vrot.slane %v107, 1
    %v109 = vadd.f32 %v107, %v108
    %v110 = vadd.f32 %v109, 0.0
    %vm111 = vcmask 1040384
    %v112 = vsel %vm111, %v100, %v110
    %113 = vst [vmem:[#allocation7] sm:$0x3] %v112
    // Predicated region
    $region22: #{tpu_custom_call.1} parent=1 // pred_check
      _
    $region23: #{tpu_custom_call.1} parent=1 // pred_check_branch
      %115 = sbr.rel (0) target = $region25
    $region24: #{tpu_custom_call.1} parent=1 // pred_region
      %s117 = ssub.s32 32, 32
      %118 = vsyncadd [#allocation4], %s117
      %s120 = sshll.u32 [#allocation7], 4
      %s121 = int_to_ptr.vmem [resolvable:$true] %s120
      %123 = dma.vmem_to_hbm [thread:$0]  %s121, 32, %s3, [#allocation4]
    $region25: #{tpu_custom_call.1} parent=1 // pred_fallthru
      _
    // Predicated region
    $region26: #{tpu_custom_call.1} parent=1 // pred_check
      _
    $region27: #{tpu_custom_call.1} parent=1 // pred_check_branch
      %125 = sbr.rel (0) target = $region29
    $region28: #{tpu_custom_call.1} parent=1 // pred_region
      %126 = dma.done [#allocation4], 32
    $region29: #{tpu_custom_call.1} parent=1 // pred_fallthru
      _
    %127 = vsyncpa [#allocation3], 1
    %128 = vsyncpa [#allocation6], 1
    %129 = vsyncpa [#allocation4], 1

</llo_original>
